<compile_context>
chip_gen: v5e
topology: v5e:2x2
jax: 0.10.0
libtpu: 0.0.40
codegen_flags: <defaults>
</compile_context>

<pallas_src>
import math

import jax
import jax.numpy as jnp
from jax.experimental import pallas as pl
from jax.experimental.pallas import tpu as pltpu


def _fixed_pos_enc_kernel(x_ref, const_ref, o_ref):
    # x_ref:     (TM, r)    f32   r consecutive original rows packed per kernel row
    # const_ref: (2, w)     f32   row 0: sigma pattern, row 1: phase offsets (0 / pi/2)
    # o_ref:     (TM, w)    f32   w = r * 2*ll, lane-dense output
    tm, r = x_ref.shape
    w = o_ref.shape[-1]
    proj_out = w // r          # 2*ll

    # Broadcast each packed row's scalar x into its proj_out-lane segment.
    xb = jnp.broadcast_to(x_ref[:, 0:1], (tm, w))
    if r > 1:
        lane = jax.lax.broadcasted_iota(jnp.int32, (1, w), 1)
        for j in range(1, r):
            # Segments written in increasing order -> only a lower-bound compare.
            xb = jnp.where(lane >= j * proj_out, x_ref[:, j:j + 1], xb)

    # cos(t) == sin(t + pi/2): one fused mul/add + a single sin polynomial.
    o_ref[...] = jnp.sin(xb * const_ref[0:1, :] + const_ref[1:2, :])


def make_sigma(proj_dims: int, val: float = 0.1) -> jnp.ndarray:
    """Matches the PyTorch module's buffer: 2*pi / val**(2*arange(ll)/proj_dims)."""
    ll = proj_dims // 2
    exb = 2.0 * jnp.linspace(0.0, ll - 1.0, ll) / proj_dims
    sigma = 2.0 * math.pi / jnp.power(val, exb)
    return sigma.reshape(1, ll).astype(jnp.float32)


def _choose_packing(proj_out: int) -> int:
    """Original rows packed per lane-dense output row (output width = r*proj_out)."""
    if proj_out >= 128:
        return 1
    lcm = proj_out * 128 // math.gcd(proj_out, 128)
    r = lcm // proj_out
    # Per-output-vreg VPU cost model: ~18 ops for phase + sin; packing adds
    # ~2*(r-1) broadcast/select ops but runs at full 128-lane utilization,
    # while r=1 runs the whole body at proj_out/128 utilization.
    base = 18.0
    packed_cost = base + 2.0 * (r - 1)
    unpacked_cost = base * 128.0 / proj_out
    return r if packed_cost <= unpacked_cost else 1


_TARGET_BLOCK_BYTES = 2 * 1024 * 1024    # ~2 MiB f32 output block (x2 double-buffered)


def fixed_positional_encoding(x: jnp.ndarray, sigma: jnp.ndarray,
                              *, target_block_bytes: int = _TARGET_BLOCK_BYTES) -> jnp.ndarray:
    """x: (..., 1) float; sigma: (1, ll) float32 -> (..., 2*ll) float32."""
    assert x.shape[-1] == 1, "expected trailing singleton dim on x"
    ll = int(sigma.shape[-1])
    proj_out = 2 * ll

    lead = x.shape[:-1]
    m = math.prod(lead) if lead else 1

    r = _choose_packing(proj_out)
    w = r * proj_out

    m_pack = pl.cdiv(m, r)
    # Width-adaptive row tile (multiple of 8 sublanes).
    tile = max(8, (target_block_bytes // (4 * w)) // 8 * 8)
    if tile >= m_pack:
        if m_pack > 512:
            # Guarantee >=2 grid programs so v7x can shard across both TCs.
            tile = max(8, ((m_pack + 1) // 2 + 7) // 8 * 8)
        else:
            tile = m_pack                  # single full-dim block (always legal)
    grid_m = pl.cdiv(m_pack, tile)
    m_pack_pad = grid_m * tile
    m_pad = m_pack_pad * r

    x_flat = x.reshape(m).astype(jnp.float32)
    if m_pad != m:
        x_flat = jnp.pad(x_flat, (0, m_pad - m))    # padded rows sliced away below
    x2 = x_flat.reshape(m_pack_pad, r)

    # Constant rows: [sigma | sigma] and [0 | pi/2] patterns tiled r times.
    sig = sigma.reshape(ll).astype(jnp.float32)
    sig_row = jnp.tile(jnp.concatenate([sig, sig]), r)                        # (w,)
    off_row = jnp.tile(jnp.concatenate(
        [jnp.zeros((ll,), jnp.float32),
         jnp.full((ll,), 0.5 * math.pi, jnp.float32)]), r)                    # (w,)
    const = jnp.stack([sig_row, off_row]).astype(jnp.float32)                 # (2, w)

    out = pl.pallas_call(
        _fixed_pos_enc_kernel,
        out_shape=jax.ShapeDtypeStruct((m_pack_pad, w), jnp.float32),
        grid_spec=pltpu.PrefetchScalarGridSpec(
            num_scalar_prefetch=0,
            grid=(grid_m,),
            in_specs=[
                pl.BlockSpec((tile, r), lambda i: (i, 0)),
                pl.BlockSpec((2, w), lambda i: (0, 0)),
            ],
            out_specs=pl.BlockSpec((tile, w), lambda i: (i, 0)),
        ),
        compiler_params=pltpu.CompilerParams(
            dimension_semantics=("parallel",)),
    )(x2, const)

    out = out.reshape(m_pad, proj_out)      # free row-major reinterpretation
    if m_pad != m:
        out = out[:m]
    return out.reshape(*lead, proj_out)


def _reference(x, sigma):
    phase = x * sigma.reshape(-1)           # (...,1)*(ll,) -> (...,ll)
    return jnp.concatenate([jnp.sin(phase), jnp.cos(phase)], axis=-1)


if __name__ == "__main__":
    keys = jax.random.split(jax.random.PRNGKey(0), 5)
    ATOL, RTOL = 5e-5, 1e-5                 # sin(t+pi/2) offset trick: ~1e-5 vs cos(t)

    # Case 1: proj_dims=32 (r=4 lane packing), row count divisible by packing.
    proj_dims = 32
    sigma = make_sigma(proj_dims, val=0.1)
    x1 = jax.random.normal(keys[0], (2, 64, 1), dtype=jnp.float32)
    out1 = jax.block_until_ready(fixed_positional_encoding(x1, sigma))
    assert out1.shape == (2, 64, proj_dims), out1.shape
    assert jnp.allclose(out1, _reference(x1, sigma), atol=ATOL, rtol=RTOL), "case1 mismatch"

    # Case 2: ragged row count -> cdiv + zero-pad + slice path.
    x2 = jax.random.normal(keys[1], (3, 50, 1), dtype=jnp.float32)
    out2 = jax.block_until_ready(fixed_positional_encoding(x2, sigma))
    assert out2.shape == (3, 50, proj_dims), out2.shape
    assert jnp.allclose(out2, _reference(x2, sigma), atol=ATOL, rtol=RTOL), "case2 mismatch"

    # Case 3: wide proj_dims (>=128) -> r=1 path.
    proj_dims3 = 256
    sigma3 = make_sigma(proj_dims3, val=0.1)
    x3 = jax.random.normal(keys[2], (2, 16, 1), dtype=jnp.float32)
    out3 = jax.block_until_ready(fixed_positional_encoding(x3, sigma3))
    assert out3.shape == (2, 16, proj_dims3), out3.shape
    assert jnp.allclose(out3, _reference(x3, sigma3), atol=ATOL, rtol=RTOL), "case3 mismatch"

    # Case 4: proj_out=96 does not divide 128 -> LCM packing (r=4, w=384).
    proj_dims4 = 96
    sigma4 = make_sigma(proj_dims4, val=0.1)
    x4 = jax.random.normal(keys[3], (2, 40, 1), dtype=jnp.float32)
    out4 = jax.block_until_ready(fixed_positional_encoding(x4, sigma4))
    assert out4.shape == (2, 40, proj_dims4), out4.shape
    assert jnp.allclose(out4, _reference(x4, sigma4), atol=ATOL, rtol=RTOL), "case4 mismatch"

    # Case 5: enough rows to force >=2 grid programs (v7x dual-TC sharding path).
    x5 = jax.random.normal(keys[4], (4, 600, 1), dtype=jnp.float32)
    out5 = jax.block_until_ready(fixed_positional_encoding(x5, sigma))
    assert out5.shape == (4, 600, proj_dims), out5.shape
    assert jnp.allclose(out5, _reference(x5, sigma), atol=ATOL, rtol=RTOL), "case5 mismatch"

    # TODO(synk): for odd proj_dims the output width is 2*(proj_dims//2), same as the PyTorch original.
    print("KERNEL_OK")
</pallas_src>

<mosaic_0001>
module attributes {stable_mosaic.version = 11 : i64} {
  func.func @_fixed_pos_enc_kernel(%arg0: i32, %arg1: memref<32x4xf32, #tpu.memory_space<vmem>>, %arg2: memref<2x128xf32, #tpu.memory_space<vmem>>, %arg3: memref<32x128xf32, #tpu.memory_space<vmem>>) attributes {dimension_semantics = [#tpu.dimension_semantics<parallel>], iteration_bounds = array<i64: 1>, scalar_prefetch = 0 : i64, scratch_operands = 0 : i64, tpu.core_type = #tpu.core_type<tc>, window_params = [{transform_indices = @transform_0, window_bounds = array<i64: 32, 4>}, {pipeline_mode = #tpu.pipeline_mode<synchronous>, transform_indices = @transform_1, window_bounds = array<i64: 2, 128>}, {transform_indices = @transform_2, window_bounds = array<i64: 32, 128>}]} {
    %c0 = arith.constant 0 : index
    %c0_0 = arith.constant 0 : index
    %0 = vector.load %arg1[%c0, %c0_0] : memref<32x4xf32, #tpu.memory_space<vmem>>, vector<32x1xf32>
    %1 = vector.shape_cast %0 : vector<32x1xf32> to vector<32x1xf32>
    %2 = vector.broadcast %1 : vector<32x1xf32> to vector<32x128xf32>
    %3 = tpu.iota {dimensions = array<i32: 1>} : vector<1x128xi32>
    %c32_i32 = arith.constant 32 : i32
    %4 = vector.broadcast %c32_i32 : i32 to vector<1x128xi32>
    %5 = arith.cmpi sge, %3, %4 : vector<1x128xi32>
    %c0_1 = arith.constant 0 : index
    %c1 = arith.constant 1 : index
    %6 = vector.load %arg1[%c0_1, %c1] : memref<32x4xf32, #tpu.memory_space<vmem>>, vector<32x1xf32>
    %7 = vector.shape_cast %5 : vector<1x128xi1> to vector<1x128xi1>
    %8 = vector.broadcast %7 : vector<1x128xi1> to vector<32x128xi1>
    %9 = vector.shape_cast %6 : vector<32x1xf32> to vector<32x1xf32>
    %10 = vector.broadcast %9 : vector<32x1xf32> to vector<32x128xf32>
    %11 = arith.select %8, %10, %2 : vector<32x128xi1>, vector<32x128xf32>
    %c64_i32 = arith.constant 64 : i32
    %12 = vector.broadcast %c64_i32 : i32 to vector<1x128xi32>
    %13 = arith.cmpi sge, %3, %12 : vector<1x128xi32>
    %c0_2 = arith.constant 0 : index
    %c2 = arith.constant 2 : index
    %14 = vector.load %arg1[%c0_2, %c2] : memref<32x4xf32, #tpu.memory_space<vmem>>, vector<32x1xf32>
    %15 = vector.shape_cast %13 : vector<1x128xi1> to vector<1x128xi1>
    %16 = vector.broadcast %15 : vector<1x128xi1> to vector<32x128xi1>
    %17 = vector.shape_cast %14 : vector<32x1xf32> to vector<32x1xf32>
    %18 = vector.broadcast %17 : vector<32x1xf32> to vector<32x128xf32>
    %19 = arith.select %16, %18, %11 : vector<32x128xi1>, vector<32x128xf32>
    %c96_i32 = arith.constant 96 : i32
    %20 = vector.broadcast %c96_i32 : i32 to vector<1x128xi32>
    %21 = arith.cmpi sge, %3, %20 : vector<1x128xi32>
    %c0_3 = arith.constant 0 : index
    %c3 = arith.constant 3 : index
    %22 = vector.load %arg1[%c0_3, %c3] : memref<32x4xf32, #tpu.memory_space<vmem>>, vector<32x1xf32>
    %23 = vector.shape_cast %21 : vector<1x128xi1> to vector<1x128xi1>
    %24 = vector.broadcast %23 : vector<1x128xi1> to vector<32x128xi1>
    %25 = vector.shape_cast %22 : vector<32x1xf32> to vector<32x1xf32>
    %26 = vector.broadcast %25 : vector<32x1xf32> to vector<32x128xf32>
    %27 = arith.select %24, %26, %19 : vector<32x128xi1>, vector<32x128xf32>
    %c0_4 = arith.constant 0 : index
    %c0_5 = arith.constant 0 : index
    %28 = vector.load %arg2[%c0_4, %c0_5] : memref<2x128xf32, #tpu.memory_space<vmem>>, vector<1x128xf32>
    %29 = vector.broadcast %28 : vector<1x128xf32> to vector<32x128xf32>
    %30 = arith.mulf %27, %29 : vector<32x128xf32>
    %c1_6 = arith.constant 1 : index
    %c0_7 = arith.constant 0 : index
    %31 = vector.load %arg2[%c1_6, %c0_7] : memref<2x128xf32, #tpu.memory_space<vmem>>, vector<1x128xf32>
    %32 = vector.broadcast %31 : vector<1x128xf32> to vector<32x128xf32>
    %33 = arith.addf %30, %32 : vector<32x128xf32>
    %34 = math.sin %33 : vector<32x128xf32>
    %c0_8 = arith.constant 0 : index
    %c0_9 = arith.constant 0 : index
    %35 = vector.load %arg3[%c0_8, %c0_9] : memref<32x128xf32, #tpu.memory_space<vmem>>, vector<32x128xf32>
    tpu.vector_store %arg3[%c0_8, %c0_9], %34 {strides = array<i32>} : memref<32x128xf32, #tpu.memory_space<vmem>>, vector<32x128xf32>,
    return
  }
  func.func @transform_0(%arg0: i32) -> (i32, i32) {
    %c0_i32 = arith.constant 0 : i32
    %c0_i32_0 = arith.constant 0 : i32
    return %arg0, %c0_i32 : i32, i32
  }
  func.func @transform_1(%arg0: i32) -> (i32, i32) {
    %c0_i32 = arith.constant 0 : i32
    %c0_i32_0 = arith.constant 0 : i32
    %c0_i32_1 = arith.constant 0 : i32
    return %c0_i32, %c0_i32_0 : i32, i32
  }
  func.func @transform_2(%arg0: i32) -> (i32, i32) {
    %c0_i32 = arith.constant 0 : i32
    %c0_i32_0 = arith.constant 0 : i32
    return %arg0, %c0_i32 : i32, i32
  }
}

</mosaic_0001>

<llo_original>
// kernel: tpu_custom_call.1
$region0: #{tpu_custom_call.1}
  #allocation0 [shape = 'u32[]', space=smem, size = 0x4, offset = 0x4, fixed_abs, tag = 'smem constant byte address 0x4 - core index']
  #allocation1 [shape = 'u32[72,128]{1,0:T(1,128)}', space=vmem, size = 0x9000, scoped, tag = 'internal scratch']
  %s0 = inlined_call_operand.vmem [shape: f32[32,4], index: 0, kind: input, shape index: {}]
  %s1 = inlined_call_operand.vmem [shape: f32[2,128], index: 1, kind: input, shape index: {}]
  %s2 = inlined_call_operand.hbm [shape: f32[32,128], index: 2, kind: output, shape index: {}]
  %s3 = sld [smem:[#allocation0]]
  $region18: #{tpu_custom_call.1} parent=0
    _
  %s5 = ssub.s32 1, %s3
  %s6 = scalar_select 0, %s5, %s3
  $region1: #{tpu_custom_call.1} parent=0
    #allocation2 [shape = 'u8[16384]{0}', space=vmem, size = 0x4000, scoped, tag = 'output window, operand 0, single buffered']
    #allocation3 [shape = 's32[1]{0}', space=sflag, size = 0x4, scoped, tag = 'scoped memory for tpu_custom_call.1']
    %7 = vsyncpa [#allocation3], 0
    // Predicated region
    $region2: #{tpu_custom_call.1} parent=1 // pred_check
      _
    $region3: #{tpu_custom_call.1} parent=1 // pred_check_branch
      %9 = sbr.rel (0) target = $region5
    $region4: #{tpu_custom_call.1} parent=1 // pred_region
      _
    $region5: #{tpu_custom_call.1} parent=1 // pred_fallthru
      _
    // Predicated region
    $region6: #{tpu_custom_call.1} parent=1 // pred_check
      _
    $region7: #{tpu_custom_call.1} parent=1 // pred_check_branch
      %11 = sbr.rel (0) target = $region9
    $region8: #{tpu_custom_call.1} parent=1 // pred_region
      _
    $region9: #{tpu_custom_call.1} parent=1 // pred_fallthru
      _
    %v12 = vld [vmem:[%s0] sm:$0xff]
    %v13 = vld [vmem:[%s0 + $0x8] sm:$0xff]
    %v14 = vld [vmem:[%s0 + $0x10] sm:$0xff]
    %v15 = vld [vmem:[%s0 + $0x18] sm:$0xff]
    %17 = vset.pattern.permute.xlu0 0
    %18 = vperm.xlu0 %17, %v12
    %v19 = vpop.permute.xlu0 %18
    %22 = vset.pattern.permute.xlu0 0
    %23 = vperm.xlu0 %22, %v13
    %v24 = vpop.permute.xlu0 %23
    %27 = vset.pattern.permute.xlu0 0
    %28 = vperm.xlu0 %27, %v14
    %v29 = vpop.permute.xlu0 %28
    %32 = vset.pattern.permute.xlu0 0
    %33 = vperm.xlu0 %32, %v15
    %v34 = vpop.permute.xlu0 %33
    %v36 = vlaneseq
    %v37 = vand.u32 %v36, 127
    %vm38 = vcmp.ge.s32.totalorder %v37, 32
    %v39 = vsel %vm38, 1, 0
    %vm40 = vcmp.eq.s32.totalorder %v39, 1
    %41 = vset.pattern.permute.xlu0 1
    %42 = vperm.xlu0 %41, %v12
    %v43 = vpop.permute.xlu0 %42
    %45 = vset.pattern.permute.xlu0 1
    %46 = vperm.xlu0 %45, %v13
    %v47 = vpop.permute.xlu0 %46
    %49 = vset.pattern.permute.xlu0 1
    %50 = vperm.xlu0 %49, %v14
    %v51 = vpop.permute.xlu0 %50
    %53 = vset.pattern.permute.xlu0 1
    %54 = vperm.xlu0 %53, %v15
    %v55 = vpop.permute.xlu0 %54
    %v57 = vsel %vm40, %v43, %v19
    %v58 = vsel %vm40, %v47, %v24
    %v59 = vsel %vm40, %v51, %v29
    %v60 = vsel %vm40, %v55, %v34
    %vm61 = vcmp.ge.s32.totalorder %v37, 64
    %v62 = vsel %vm61, 1, 0
    %vm63 = vcmp.eq.s32.totalorder %v62, 1
    %64 = vset.pattern.permute.xlu0 2
    %65 = vperm.xlu0 %64, %v12
    %v66 = vpop.permute.xlu0 %65
    %68 = vset.pattern.permute.xlu0 2
    %69 = vperm.xlu0 %68, %v13
    %v70 = vpop.permute.xlu0 %69
    %72 = vset.pattern.permute.xlu0 2
    %73 = vperm.xlu0 %72, %v14
    %v74 = vpop.permute.xlu0 %73
    %76 = vset.pattern.permute.xlu0 2
    %77 = vperm.xlu0 %76, %v15
    %v78 = vpop.permute.xlu0 %77
    %v80 = vsel %vm63, %v66, %v57
    %v81 = vsel %vm63, %v70, %v58
    %v82 = vsel %vm63, %v74, %v59
    %v83 = vsel %vm63, %v78, %v60
    %vm84 = vcmp.ge.s32.totalorder %v37, 96
    %v85 = vsel %vm84, 1, 0
    %vm86 = vcmp.eq.s32.totalorder %v85, 1
    %87 = vset.pattern.permute.xlu0 3
    %88 = vperm.xlu0 %87, %v12
    %v89 = vpop.permute.xlu0 %88
    %91 = vset.pattern.permute.xlu0 3
    %92 = vperm.xlu0 %91, %v13
    %v93 = vpop.permute.xlu0 %92
    %95 = vset.pattern.permute.xlu0 3
    %96 = vperm.xlu0 %95, %v14
    %v97 = vpop.permute.xlu0 %96
    %99 = vset.pattern.permute.xlu0 3
    %100 = vperm.xlu0 %99, %v15
    %v101 = vpop.permute.xlu0 %100
    %v103 = vsel %vm86, %v89, %v80
    %v104 = vsel %vm86, %v93, %v81
    %v105 = vsel %vm86, %v97, %v82
    %v106 = vsel %vm86, %v101, %v83
    %v107 = vld [vmem:[%s1] sm:$0x1]
    %v108 = vperm.slane %v107, 0
    %v109 = vmul.f32 %v103, %v108
    %v110 = vmul.f32 %v104, %v108
    %v111 = vmul.f32 %v105, %v108
    %v112 = vmul.f32 %v106, %v108
    %v113 = vld [vmem:[%s1 + $0x1] sm:$0x1]
    %v114 = vperm.slane %v113, 0
    %v115 = vadd.f32 %v109, %v114
    %v116 = vadd.f32 %v110, %v114
    %v117 = vadd.f32 %v111, %v114
    %v118 = vadd.f32 %v112, %v114
    %v119 = vand.u32 2147483647, %v115
    %vm120 = vcmp.le.f32.partialorder %v119, 0.7853982
    %vm121 = vcmp.lt.s32.totalorder %v115, 0
    %v122 = vand.u32 %v115, 2139095040
    %v123 = vshrl.u32 %v122, 23
    %v124 = vsub.s32 %v123, 127
    %v125 = vand.u32 2147483647, %v115
    %v126 = vand.u32 %v125, 8388607
    %v127 = vor.u32 %v126, 8388608
    %v128 = vsub.s32 0, %v127
    %v129 = vadd.s32 %v124, 1
    %vm130 = vcmp.gt.s32.totalorder %v129, 0
    %v131 = vsel %vm130, %v129, 0
    %v132 = vshrl.u32 %v131, 5
    %v133 = vand.u32 %v131, 31
    %v134 = vsub.s32 32, %v133
    %v135 = vshrl.u32 683565275, %v134
    %v136 = vshll.u32 683565275, %v133
    %v137 = vshrl.u32 2475754826, %v134
    %v138 = vor.u32 %v136, %v137
    %v139 = vshll.u32 2475754826, %v133
    %v140 = vshrl.u32 2131351028, %v134
    %v141 = vor.u32 %v139, %v140
    %v142 = vshll.u32 2131351028, %v133
    %v143 = vshrl.u32 2102212464, %v134
    %v144 = vor.u32 %v142, %v143
    %v145 = vshll.u32 2102212464, %v133
    %v146 = vshrl.u32 920167782, %v134
    %v147 = vor.u32 %v145, %v146
    %v148 = vshll.u32 920167782, %v133
    %v149 = vshrl.u32 1326507024, %v134
    %v150 = vor.u32 %v148, %v149
    %vm151 = vcmp.lt.s32.totalorder %v132, 1
    %vm152 = vcmp.lt.s32.totalorder %v132, 2
    %vm153 = vcmp.lt.s32.totalorder %v132, 3
    %vm154 = vcmp.lt.s32.totalorder %v132, 4
    %v155 = vsel %vm151, %v135, %v138
    %v156 = vsel %vm154, %v144, 2102212464
    %v157 = vsel %vm153, %v141, %v156
    %v158 = vsel %vm152, %v155, %v157
    %v159 = vsel %vm151, %v138, %v141
    %v160 = vsel %vm154, %v147, 920167782
    %v161 = vsel %vm153, %v144, %v160
    %v162 = vsel %vm152, %v159, %v161
    %v163 = vsel %vm151, %v141, %v144
    %v164 = vsel %vm154, %v150, 1326507024
    %v165 = vsel %vm153, %v147, %v164
    %v166 = vsel %vm152, %v163, %v165
    %v167 = vshll.u32 %v127, 8
    %v168 = vand.u32 %v167, 65535
    %v169 = vshrl.u32 %v167, 16
    %v170 = vand.u32 %v166, 65535
    %v171 = vshrl.u32 %v166, 16
    %v172 = vmul.u32 %v168, %v170
    %v173 = vmul.u32 %v168, %v171
    %v174 = vmul.u32 %v169, %v170
    %v175 = vmul.u32 %v169, %v171
    %v176 = vshll.u32 %v173, 16
    %v177 = vshrl.u32 %v173, 16
    %v178 = vshll.u32 %v174, 16
    %v179 = vshrl.u32 %v174, 16
    %vm180 = vc.u32 %v172, %v176
    %v181 = vsel %vm180, 1, 0
    %v182 = vadd.s32 %v172, %v176
    %v183 = vadd.s32 %v175, %v181
    %vm184 = vc.u32 %v182, %v178
    %v185 = vsel %vm184, 1, 0
    %v186 = vadd.s32 %v182, %v178
    %v187 = vadd.s32 %v183, %v185
    %v188 = vadd.s32 %v187, %v177
    %v189 = vadd.s32 %v188, %v179
    %v190 = vand.u32 %v167, 65535
    %v191 = vshrl.u32 %v167, 16
    %v192 = vand.u32 %v162, 65535
    %v193 = vshrl.u32 %v162, 16
    %v194 = vmul.u32 %v190, %v192
    %v195 = vmul.u32 %v190, %v193
    %v196 = vmul.u32 %v191, %v192
    %v197 = vmul.u32 %v191, %v193
    %v198 = vshll.u32 %v195, 16
    %v199 = vshrl.u32 %v195, 16
    %v200 = vshll.u32 %v196, 16
    %v201 = vshrl.u32 %v196, 16
    %vm202 = vc.u32 %v194, %v198
    %v203 = vsel %vm202, 1, 0
    %v204 = vadd.s32 %v194, %v198
    %v205 = vadd.s32 %v197, %v203
    %vm206 = vc.u32 %v204, %v200
    %v207 = vsel %vm206, 1, 0
    %v208 = vadd.s32 %v204, %v200
    %v209 = vadd.s32 %v205, %v207
    %v210 = vadd.s32 %v209, %v199
    %v211 = vadd.s32 %v210, %v201
    %v212 = vmul.u32 %v167, %v158
    %v213 = vadd.s32 %v189, %v208
    %vm214 = vc.u32 %v189, %v208
    %v215 = vadd.s32 %v211, 1
    %v216 = vsel %vm214, %v215, %v211
    %v217 = vadd.s32 %v212, %v216
    %v218 = vadd.s32 %v217, 536870912
    %v219 = vshrl.u32 %v218, 30
    %v220 = vshll.u32 %v219, 30
    %v221 = vsub.s32 %v217, %v220
    %vm222 = vcmp.lt.s32.totalorder %v221, 0
    %v223 = vsub.s32 0, %v221
    %v224 = vsel %vm222, %v223, %v221
    %v225 = vclz %v224
    %v226 = vsub.s32 %v225, 2
    %vm227 = vcmp.gt.s32.totalorder 0, %v226
    %v228 = vsel %vm227, 0, %v226
    %v229 = vsub.s32 32, %v228
    %v230 = vshll.u32 %v221, %v228
    %v231 = vshrl.u32 %v213, %v229
    %v232 = vor.u32 %v230, %v231
    %v233 = vsub.s32 4294967266, %v228
    %v234 = vadd.s32 %v233, 127
    %v235 = vshll.u32 %v234, 23
    %v236 = vor.u32 4788187, %v235
    %v237 = vand.u32 2147483647, %v236
    %v239 = vcvt.s32.f32 %v232
    %v240 = vmul.f32 %v239, %v237
    %v241 = vxor.u32 %v240, 2147483648
    %v242 = vsel %vm121, %v241, %v240
    %v243 = vsub.s32 4, %v219
    %v244 = vsel %vm121, %v243, %v219
    %v245 = vsel %vm120, %v115, %v242
    %v246 = vsel %vm120, 0, %v244
    %v247 = vmul.f32 %v245, %v245
    %v248 = vmul.f32 %v247, -0.001358992
    %v249 = vadd.f32 %v248, 0.041655596
    %v250 = vmul.f32 %v247, %v249
    %v251 = vadd.f32 %v250, -0.4999988
    %v252 = vmul.f32 %v247, %v251
    %v253 = vadd.f32 1.0, %v252
    %v254 = vmul.f32 %v245, %v245
    %v255 = vmul.f32 %v254, -0.00019511016
    %v256 = vadd.f32 %v255, 0.008332121
    %v257 = vmul.f32 %v254, %v256
    %v258 = vadd.f32 %v257, -0.16666654
    %v259 = vmul.f32 %v254, %v258
    %v260 = vadd.f32 %v259, 1.0
    %v261 = vmul.f32 %v260, %v245
    %vm262 = vweird.f32 %v115
    %v263 = vadd.s32 %v246, 3
    %v264 = vand.u32 %v263, 3
    %vm265 = vcmp.lt.s32.totalorder %v264, 2
    %vm266 = vcmp.eq.s32.totalorder %v264, 0
    %v267 = vxor.u32 %v261, 2147483648
    %v268 = vsel %vm266, %v253, %v267
    %vm269 = vcmp.eq.s32.totalorder %v264, 2
    %v270 = vxor.u32 %v253, 2147483648
    %v271 = vsel %vm269, %v270, %v261
    %v272 = vsel %vm265, %v268, %v271
    %v273 = vsel %vm262, nan, %v272
    %v274 = vand.u32 2147483647, %v116
    %vm275 = vcmp.le.f32.partialorder %v274, 0.7853982
    %vm276 = vcmp.lt.s32.totalorder %v116, 0
    %v277 = vand.u32 %v116, 2139095040
    %v278 = vshrl.u32 %v277, 23
    %v279 = vsub.s32 %v278, 127
    %v280 = vand.u32 2147483647, %v116
    %v281 = vand.u32 %v280, 8388607
    %v282 = vor.u32 %v281, 8388608
    %v283 = vsub.s32 0, %v282
    %v284 = vadd.s32 %v279, 1
    %vm285 = vcmp.gt.s32.totalorder %v284, 0
    %v286 = vsel %vm285, %v284, 0
    %v287 = vshrl.u32 %v286, 5
    %v288 = vand.u32 %v286, 31
    %v289 = vsub.s32 32, %v288
    %v290 = vshrl.u32 683565275, %v289
    %v291 = vshll.u32 683565275, %v288
    %v292 = vshrl.u32 2475754826, %v289
    %v293 = vor.u32 %v291, %v292
    %v294 = vshll.u32 2475754826, %v288
    %v295 = vshrl.u32 2131351028, %v289
    %v296 = vor.u32 %v294, %v295
    %v297 = vshll.u32 2131351028, %v288
    %v298 = vshrl.u32 2102212464, %v289
    %v299 = vor.u32 %v297, %v298
    %v300 = vshll.u32 2102212464, %v288
    %v301 = vshrl.u32 920167782, %v289
    %v302 = vor.u32 %v300, %v301
    %v303 = vshll.u32 920167782, %v288
    %v304 = vshrl.u32 1326507024, %v289
    %v305 = vor.u32 %v303, %v304
    %vm306 = vcmp.lt.s32.totalorder %v287, 1
    %vm307 = vcmp.lt.s32.totalorder %v287, 2
    %vm308 = vcmp.lt.s32.totalorder %v287, 3
    %vm309 = vcmp.lt.s32.totalorder %v287, 4
    %v310 = vsel %vm306, %v290, %v293
    %v311 = vsel %vm309, %v299, 2102212464
    %v312 = vsel %vm308, %v296, %v311
    %v313 = vsel %vm307, %v310, %v312
    %v314 = vsel %vm306, %v293, %v296
    %v315 = vsel %vm309, %v302, 920167782
    %v316 = vsel %vm308, %v299, %v315
    %v317 = vsel %vm307, %v314, %v316
    %v318 = vsel %vm306, %v296, %v299
    %v319 = vsel %vm309, %v305, 1326507024
    %v320 = vsel %vm308, %v302, %v319
    %v321 = vsel %vm307, %v318, %v320
    %v322 = vshll.u32 %v282, 8
    %v323 = vand.u32 %v322, 65535
    %v324 = vshrl.u32 %v322, 16
    %v325 = vand.u32 %v321, 65535
    %v326 = vshrl.u32 %v321, 16
    %v327 = vmul.u32 %v323, %v325
    %v328 = vmul.u32 %v323, %v326
    %v329 = vmul.u32 %v324, %v325
    %v330 = vmul.u32 %v324, %v326
    %v331 = vshll.u32 %v328, 16
    %v332 = vshrl.u32 %v328, 16
    %v333 = vshll.u32 %v329, 16
    %v334 = vshrl.u32 %v329, 16
    %vm335 = vc.u32 %v327, %v331
    %v336 = vsel %vm335, 1, 0
    %v337 = vadd.s32 %v327, %v331
    %v338 = vadd.s32 %v330, %v336
    %vm339 = vc.u32 %v337, %v333
    %v340 = vsel %vm339, 1, 0
    %v341 = vadd.s32 %v337, %v333
    %v342 = vadd.s32 %v338, %v340
    %v343 = vadd.s32 %v342, %v332
    %v344 = vadd.s32 %v343, %v334
    %v345 = vand.u32 %v322, 65535
    %v346 = vshrl.u32 %v322, 16
    %v347 = vand.u32 %v317, 65535
    %v348 = vshrl.u32 %v317, 16
    %v349 = vmul.u32 %v345, %v347
    %v350 = vmul.u32 %v345, %v348
    %v351 = vmul.u32 %v346, %v347
    %v352 = vmul.u32 %v346, %v348
    %v353 = vshll.u32 %v350, 16
    %v354 = vshrl.u32 %v350, 16
    %v355 = vshll.u32 %v351, 16
    %v356 = vshrl.u32 %v351, 16
    %vm357 = vc.u32 %v349, %v353
    %v358 = vsel %vm357, 1, 0
    %v359 = vadd.s32 %v349, %v353
    %v360 = vadd.s32 %v352, %v358
    %vm361 = vc.u32 %v359, %v355
    %v362 = vsel %vm361, 1, 0
    %v363 = vadd.s32 %v359, %v355
    %v364 = vadd.s32 %v360, %v362
    %v365 = vadd.s32 %v364, %v354
    %v366 = vadd.s32 %v365, %v356
    %v367 = vmul.u32 %v322, %v313
    %v368 = vadd.s32 %v344, %v363
    %vm369 = vc.u32 %v344, %v363
    %v370 = vadd.s32 %v366, 1
    %v371 = vsel %vm369, %v370, %v366
    %v372 = vadd.s32 %v367, %v371
    %v373 = vadd.s32 %v372, 536870912
    %v374 = vshrl.u32 %v373, 30
    %v375 = vshll.u32 %v374, 30
    %v376 = vsub.s32 %v372, %v375
    %vm377 = vcmp.lt.s32.totalorder %v376, 0
    %v378 = vsub.s32 0, %v376
    %v379 = vsel %vm377, %v378, %v376
    %v380 = vclz %v379
    %v381 = vsub.s32 %v380, 2
    %vm382 = vcmp.gt.s32.totalorder 0, %v381
    %v383 = vsel %vm382, 0, %v381
    %v384 = vsub.s32 32, %v383
    %v385 = vshll.u32 %v376, %v383
    %v386 = vshrl.u32 %v368, %v384
    %v387 = vor.u32 %v385, %v386
    %v388 = vsub.s32 4294967266, %v383
    %v389 = vadd.s32 %v388, 127
    %v390 = vshll.u32 %v389, 23
    %v391 = vor.u32 4788187, %v390
    %v392 = vand.u32 2147483647, %v391
    %v394 = vcvt.s32.f32 %v387
    %v395 = vmul.f32 %v394, %v392
    %v396 = vxor.u32 %v395, 2147483648
    %v397 = vsel %vm276, %v396, %v395
    %v398 = vsub.s32 4, %v374
    %v399 = vsel %vm276, %v398, %v374
    %v400 = vsel %vm275, %v116, %v397
    %v401 = vsel %vm275, 0, %v399
    %v402 = vmul.f32 %v400, %v400
    %v403 = vmul.f32 %v402, -0.001358992
    %v404 = vadd.f32 %v403, 0.041655596
    %v405 = vmul.f32 %v402, %v404
    %v406 = vadd.f32 %v405, -0.4999988
    %v407 = vmul.f32 %v402, %v406
    %v408 = vadd.f32 1.0, %v407
    %v409 = vmul.f32 %v400, %v400
    %v410 = vmul.f32 %v409, -0.00019511016
    %v411 = vadd.f32 %v410, 0.008332121
    %v412 = vmul.f32 %v409, %v411
    %v413 = vadd.f32 %v412, -0.16666654
    %v414 = vmul.f32 %v409, %v413
    %v415 = vadd.f32 %v414, 1.0
    %v416 = vmul.f32 %v415, %v400
    %vm417 = vweird.f32 %v116
    %v418 = vadd.s32 %v401, 3
    %v419 = vand.u32 %v418, 3
    %vm420 = vcmp.lt.s32.totalorder %v419, 2
    %vm421 = vcmp.eq.s32.totalorder %v419, 0
    %v422 = vxor.u32 %v416, 2147483648
    %v423 = vsel %vm421, %v408, %v422
    %vm424 = vcmp.eq.s32.totalorder %v419, 2
    %v425 = vxor.u32 %v408, 2147483648
    %v426 = vsel %vm424, %v425, %v416
    %v427 = vsel %vm420, %v423, %v426
    %v428 = vsel %vm417, nan, %v427
    %v429 = vand.u32 2147483647, %v117
    %vm430 = vcmp.le.f32.partialorder %v429, 0.7853982
    %vm431 = vcmp.lt.s32.totalorder %v117, 0
    %v432 = vand.u32 %v117, 2139095040
    %v433 = vshrl.u32 %v432, 23
    %v434 = vsub.s32 %v433, 127
    %v435 = vand.u32 2147483647, %v117
    %v436 = vand.u32 %v435, 8388607
    %v437 = vor.u32 %v436, 8388608
    %v438 = vsub.s32 0, %v437
    %v439 = vadd.s32 %v434, 1
    %vm440 = vcmp.gt.s32.totalorder %v439, 0
    %v441 = vsel %vm440, %v439, 0
    %v442 = vshrl.u32 %v441, 5
    %v443 = vand.u32 %v441, 31
    %v444 = vsub.s32 32, %v443
    %v445 = vshrl.u32 683565275, %v444
    %v446 = vshll.u32 683565275, %v443
    %v447 = vshrl.u32 2475754826, %v444
    %v448 = vor.u32 %v446, %v447
    %v449 = vshll.u32 2475754826, %v443
    %v450 = vshrl.u32 2131351028, %v444
    %v451 = vor.u32 %v449, %v450
    %v452 = vshll.u32 2131351028, %v443
    %v453 = vshrl.u32 2102212464, %v444
    %v454 = vor.u32 %v452, %v453
    %v455 = vshll.u32 2102212464, %v443
    %v456 = vshrl.u32 920167782, %v444
    %v457 = vor.u32 %v455, %v456
    %v458 = vshll.u32 920167782, %v443
    %v459 = vshrl.u32 1326507024, %v444
    %v460 = vor.u32 %v458, %v459
    %vm461 = vcmp.lt.s32.totalorder %v442, 1
    %vm462 = vcmp.lt.s32.totalorder %v442, 2
    %vm463 = vcmp.lt.s32.totalorder %v442, 3
    %vm464 = vcmp.lt.s32.totalorder %v442, 4
    %v465 = vsel %vm461, %v445, %v448
    %v466 = vsel %vm464, %v454, 2102212464
    %v467 = vsel %vm463, %v451, %v466
    %v468 = vsel %vm462, %v465, %v467
    %v469 = vsel %vm461, %v448, %v451
    %v470 = vsel %vm464, %v457, 920167782
    %v471 = vsel %vm463, %v454, %v470
    %v472 = vsel %vm462, %v469, %v471
    %v473 = vsel %vm461, %v451, %v454
    %v474 = vsel %vm464, %v460, 1326507024
    %v475 = vsel %vm463, %v457, %v474
    %v476 = vsel %vm462, %v473, %v475
    %v477 = vshll.u32 %v437, 8
    %v478 = vand.u32 %v477, 65535
    %v479 = vshrl.u32 %v477, 16
    %v480 = vand.u32 %v476, 65535
    %v481 = vshrl.u32 %v476, 16
    %v482 = vmul.u32 %v478, %v480
    %v483 = vmul.u32 %v478, %v481
    %v484 = vmul.u32 %v479, %v480
    %v485 = vmul.u32 %v479, %v481
    %v486 = vshll.u32 %v483, 16
    %v487 = vshrl.u32 %v483, 16
    %v488 = vshll.u32 %v484, 16
    %v489 = vshrl.u32 %v484, 16
    %vm490 = vc.u32 %v482, %v486
    %v491 = vsel %vm490, 1, 0
    %v492 = vadd.s32 %v482, %v486
    %v493 = vadd.s32 %v485, %v491
    %vm494 = vc.u32 %v492, %v488
    %v495 = vsel %vm494, 1, 0
    %v496 = vadd.s32 %v492, %v488
    %v497 = vadd.s32 %v493, %v495
    %v498 = vadd.s32 %v497, %v487
    %v499 = vadd.s32 %v498, %v489
    %v500 = vand.u32 %v477, 65535
    %v501 = vshrl.u32 %v477, 16
    %v502 = vand.u32 %v472, 65535
    %v503 = vshrl.u32 %v472, 16
    %v504 = vmul.u32 %v500, %v502
    %v505 = vmul.u32 %v500, %v503
    %v506 = vmul.u32 %v501, %v502
    %v507 = vmul.u32 %v501, %v503
    %v508 = vshll.u32 %v505, 16
    %v509 = vshrl.u32 %v505, 16
    %v510 = vshll.u32 %v506, 16
    %v511 = vshrl.u32 %v506, 16
    %vm512 = vc.u32 %v504, %v508
    %v513 = vsel %vm512, 1, 0
    %v514 = vadd.s32 %v504, %v508
    %v515 = vadd.s32 %v507, %v513
    %vm516 = vc.u32 %v514, %v510
    %v517 = vsel %vm516, 1, 0
    %v518 = vadd.s32 %v514, %v510
    %v519 = vadd.s32 %v515, %v517
    %v520 = vadd.s32 %v519, %v509
    %v521 = vadd.s32 %v520, %v511
    %v522 = vmul.u32 %v477, %v468
    %v523 = vadd.s32 %v499, %v518
    %vm524 = vc.u32 %v499, %v518
    %v525 = vadd.s32 %v521, 1
    %v526 = vsel %vm524, %v525, %v521
    %v527 = vadd.s32 %v522, %v526
    %v528 = vadd.s32 %v527, 536870912
    %v529 = vshrl.u32 %v528, 30
    %v530 = vshll.u32 %v529, 30
    %v531 = vsub.s32 %v527, %v530
    %vm532 = vcmp.lt.s32.totalorder %v531, 0
    %v533 = vsub.s32 0, %v531
    %v534 = vsel %vm532, %v533, %v531
    %v535 = vclz %v534
    %v536 = vsub.s32 %v535, 2
    %vm537 = vcmp.gt.s32.totalorder 0, %v536
    %v538 = vsel %vm537, 0, %v536
    %v539 = vsub.s32 32, %v538
    %v540 = vshll.u32 %v531, %v538
    %v541 = vshrl.u32 %v523, %v539
    %v542 = vor.u32 %v540, %v541
    %v543 = vsub.s32 4294967266, %v538
    %v544 = vadd.s32 %v543, 127
    %v545 = vshll.u32 %v544, 23
    %v546 = vor.u32 4788187, %v545
    %v547 = vand.u32 2147483647, %v546
    %v549 = vcvt.s32.f32 %v542
    %v550 = vmul.f32 %v549, %v547
    %v551 = vxor.u32 %v550, 2147483648
    %v552 = vsel %vm431, %v551, %v550
    %v553 = vsub.s32 4, %v529
    %v554 = vsel %vm431, %v553, %v529
    %v555 = vsel %vm430, %v117, %v552
    %v556 = vsel %vm430, 0, %v554
    %v557 = vmul.f32 %v555, %v555
    %v558 = vmul.f32 %v557, -0.001358992
    %v559 = vadd.f32 %v558, 0.041655596
    %v560 = vmul.f32 %v557, %v559
    %v561 = vadd.f32 %v560, -0.4999988
    %v562 = vmul.f32 %v557, %v561
    %v563 = vadd.f32 1.0, %v562
    %v564 = vmul.f32 %v555, %v555
    %v565 = vmul.f32 %v564, -0.00019511016
    %v566 = vadd.f32 %v565, 0.008332121
    %v567 = vmul.f32 %v564, %v566
    %v568 = vadd.f32 %v567, -0.16666654
    %v569 = vmul.f32 %v564, %v568
    %v570 = vadd.f32 %v569, 1.0
    %v571 = vmul.f32 %v570, %v555
    %vm572 = vweird.f32 %v117
    %v573 = vadd.s32 %v556, 3
    %v574 = vand.u32 %v573, 3
    %vm575 = vcmp.lt.s32.totalorder %v574, 2
    %vm576 = vcmp.eq.s32.totalorder %v574, 0
    %v577 = vxor.u32 %v571, 2147483648
    %v578 = vsel %vm576, %v563, %v577
    %vm579 = vcmp.eq.s32.totalorder %v574, 2
    %v580 = vxor.u32 %v563, 2147483648
    %v581 = vsel %vm579, %v580, %v571
    %v582 = vsel %vm575, %v578, %v581
    %v583 = vsel %vm572, nan, %v582
    %v584 = vand.u32 2147483647, %v118
    %vm585 = vcmp.le.f32.partialorder %v584, 0.7853982
    %vm586 = vcmp.lt.s32.totalorder %v118, 0
    %v587 = vand.u32 %v118, 2139095040
    %v588 = vshrl.u32 %v587, 23
    %v589 = vsub.s32 %v588, 127
    %v590 = vand.u32 2147483647, %v118
    %v591 = vand.u32 %v590, 8388607
    %v592 = vor.u32 %v591, 8388608
    %v593 = vsub.s32 0, %v592
    %v594 = vadd.s32 %v589, 1
    %vm595 = vcmp.gt.s32.totalorder %v594, 0
    %v596 = vsel %vm595, %v594, 0
    %v597 = vshrl.u32 %v596, 5
    %v598 = vand.u32 %v596, 31
    %v599 = vsub.s32 32, %v598
    %v600 = vshrl.u32 683565275, %v599
    %v601 = vshll.u32 683565275, %v598
    %v602 = vshrl.u32 2475754826, %v599
    %v603 = vor.u32 %v601, %v602
    %v604 = vshll.u32 2475754826, %v598
    %v605 = vshrl.u32 2131351028, %v599
    %v606 = vor.u32 %v604, %v605
    %v607 = vshll.u32 2131351028, %v598
    %v608 = vshrl.u32 2102212464, %v599
    %v609 = vor.u32 %v607, %v608
    %v610 = vshll.u32 2102212464, %v598
    %v611 = vshrl.u32 920167782, %v599
    %v612 = vor.u32 %v610, %v611
    %v613 = vshll.u32 920167782, %v598
    %v614 = vshrl.u32 1326507024, %v599
    %v615 = vor.u32 %v613, %v614
    %vm616 = vcmp.lt.s32.totalorder %v597, 1
    %vm617 = vcmp.lt.s32.totalorder %v597, 2
    %vm618 = vcmp.lt.s32.totalorder %v597, 3
    %vm619 = vcmp.lt.s32.totalorder %v597, 4
    %v620 = vsel %vm616, %v600, %v603
    %v621 = vsel %vm619, %v609, 2102212464
    %v622 = vsel %vm618, %v606, %v621
    %v623 = vsel %vm617, %v620, %v622
    %v624 = vsel %vm616, %v603, %v606
    %v625 = vsel %vm619, %v612, 920167782
    %v626 = vsel %vm618, %v609, %v625
    %v627 = vsel %vm617, %v624, %v626
    %v628 = vsel %vm616, %v606, %v609
    %v629 = vsel %vm619, %v615, 1326507024
    %v630 = vsel %vm618, %v612, %v629
    %v631 = vsel %vm617, %v628, %v630
    %v632 = vshll.u32 %v592, 8
    %v633 = vand.u32 %v632, 65535
    %v634 = vshrl.u32 %v632, 16
    %v635 = vand.u32 %v631, 65535
    %v636 = vshrl.u32 %v631, 16
    %v637 = vmul.u32 %v633, %v635
    %v638 = vmul.u32 %v633, %v636
    %v639 = vmul.u32 %v634, %v635
    %v640 = vmul.u32 %v634, %v636
    %v641 = vshll.u32 %v638, 16
    %v642 = vshrl.u32 %v638, 16
    %v643 = vshll.u32 %v639, 16
    %v644 = vshrl.u32 %v639, 16
    %vm645 = vc.u32 %v637, %v641
    %v646 = vsel %vm645, 1, 0
    %v647 = vadd.s32 %v637, %v641
    %v648 = vadd.s32 %v640, %v646
    %vm649 = vc.u32 %v647, %v643
    %v650 = vsel %vm649, 1, 0
    %v651 = vadd.s32 %v647, %v643
    %v652 = vadd.s32 %v648, %v650
    %v653 = vadd.s32 %v652, %v642
    %v654 = vadd.s32 %v653, %v644
    %v655 = vand.u32 %v632, 65535
    %v656 = vshrl.u32 %v632, 16
    %v657 = vand.u32 %v627, 65535
    %v658 = vshrl.u32 %v627, 16
    %v659 = vmul.u32 %v655, %v657
    %v660 = vmul.u32 %v655, %v658
    %v661 = vmul.u32 %v656, %v657
    %v662 = vmul.u32 %v656, %v658
    %v663 = vshll.u32 %v660, 16
    %v664 = vshrl.u32 %v660, 16
    %v665 = vshll.u32 %v661, 16
    %v666 = vshrl.u32 %v661, 16
    %vm667 = vc.u32 %v659, %v663
    %v668 = vsel %vm667, 1, 0
    %v669 = vadd.s32 %v659, %v663
    %v670 = vadd.s32 %v662, %v668
    %vm671 = vc.u32 %v669, %v665
    %v672 = vsel %vm671, 1, 0
    %v673 = vadd.s32 %v669, %v665
    %v674 = vadd.s32 %v670, %v672
    %v675 = vadd.s32 %v674, %v664
    %v676 = vadd.s32 %v675, %v666
    %v677 = vmul.u32 %v632, %v623
    %v678 = vadd.s32 %v654, %v673
    %vm679 = vc.u32 %v654, %v673
    %v680 = vadd.s32 %v676, 1
    %v681 = vsel %vm679, %v680, %v676
    %v682 = vadd.s32 %v677, %v681
    %v683 = vadd.s32 %v682, 536870912
    %v684 = vshrl.u32 %v683, 30
    %v685 = vshll.u32 %v684, 30
    %v686 = vsub.s32 %v682, %v685
    %vm687 = vcmp.lt.s32.totalorder %v686, 0
    %v688 = vsub.s32 0, %v686
    %v689 = vsel %vm687, %v688, %v686
    %v690 = vclz %v689
    %v691 = vsub.s32 %v690, 2
    %vm692 = vcmp.gt.s32.totalorder 0, %v691
    %v693 = vsel %vm692, 0, %v691
    %v694 = vsub.s32 32, %v693
    %v695 = vshll.u32 %v686, %v693
    %v696 = vshrl.u32 %v678, %v694
    %v697 = vor.u32 %v695, %v696
    %v698 = vsub.s32 4294967266, %v693
    %v699 = vadd.s32 %v698, 127
    %v700 = vshll.u32 %v699, 23
    %v701 = vor.u32 4788187, %v700
    %v702 = vand.u32 2147483647, %v701
    %v704 = vcvt.s32.f32 %v697
    %v705 = vmul.f32 %v704, %v702
    %v706 = vxor.u32 %v705, 2147483648
    %v707 = vsel %vm586, %v706, %v705
    %v708 = vsub.s32 4, %v684
    %v709 = vsel %vm586, %v708, %v684
    %v710 = vsel %vm585, %v118, %v707
    %v711 = vsel %vm585, 0, %v709
    %v712 = vmul.f32 %v710, %v710
    %v713 = vmul.f32 %v712, -0.001358992
    %v714 = vadd.f32 %v713, 0.041655596
    %v715 = vmul.f32 %v712, %v714
    %v716 = vadd.f32 %v715, -0.4999988
    %v717 = vmul.f32 %v712, %v716
    %v718 = vadd.f32 1.0, %v717
    %v719 = vmul.f32 %v710, %v710
    %v720 = vmul.f32 %v719, -0.00019511016
    %v721 = vadd.f32 %v720, 0.008332121
    %v722 = vmul.f32 %v719, %v721
    %v723 = vadd.f32 %v722, -0.16666654
    %v724 = vmul.f32 %v719, %v723
    %v725 = vadd.f32 %v724, 1.0
    %v726 = vmul.f32 %v725, %v710
    %vm727 = vweird.f32 %v118
    %v728 = vadd.s32 %v711, 3
    %v729 = vand.u32 %v728, 3
    %vm730 = vcmp.lt.s32.totalorder %v729, 2
    %vm731 = vcmp.eq.s32.totalorder %v729, 0
    %v732 = vxor.u32 %v726, 2147483648
    %v733 = vsel %vm731, %v718, %v732
    %vm734 = vcmp.eq.s32.totalorder %v729, 2
    %v735 = vxor.u32 %v718, 2147483648
    %v736 = vsel %vm734, %v735, %v726
    %v737 = vsel %vm730, %v733, %v736
    %v738 = vsel %vm727, nan, %v737
    %739 = vst [vmem:[#allocation2] sm:$0xff] %v273
    %740 = vst [vmem:[#allocation2 + $0x8] sm:$0xff] %v428
    %741 = vst [vmem:[#allocation2 + $0x10] sm:$0xff] %v583
    %742 = vst [vmem:[#allocation2 + $0x18] sm:$0xff] %v738
    // Predicated region
    $region10: #{tpu_custom_call.1} parent=1 // pred_check
      _
    $region11: #{tpu_custom_call.1} parent=1 // pred_check_branch
      %744 = sbr.rel (0) target = $region13
    $region12: #{tpu_custom_call.1} parent=1 // pred_region
      %746 = vsyncadd [#allocation3], 0
      %s747 = sshll.u32 [#allocation2], 4
      %s748 = int_to_ptr.vmem [resolvable:$true] %s747
      %s749 = sshll.u32 %s2, 4
      %s750 = int_to_ptr.hbm [resolvable:$true] %s749
      %755 = dma.vmem_to_hbm [thread:$0]  %s748, 512, %s750, [#allocation3], 128, 128, 8
    $region13: #{tpu_custom_call.1} parent=1 // pred_fallthru
      _
    // Predicated region
    $region14: #{tpu_custom_call.1} parent=1 // pred_check
      _
    $region15: #{tpu_custom_call.1} parent=1 // pred_check_branch
      %757 = sbr.rel (0) target = $region17
    $region16: #{tpu_custom_call.1} parent=1 // pred_region
      %759 = dma.done [#allocation3], 512
    $region17: #{tpu_custom_call.1} parent=1 // pred_fallthru
      _
    %760 = vsyncpa [#allocation3], 1

</llo_original>
